<compile_context>
chip_gen: v7x
topology: tpu7x:2x2x1
jax: 0.10.0
libtpu: 0.0.40
codegen_flags: <defaults>
</compile_context>

<pallas_src>
import functools

import jax
import jax.numpy as jnp
from jax.experimental import pallas as pl
from jax.experimental.pallas import tpu as pltpu


def _round_up(x, m):
    return ((x + m - 1) // m) * m


def _cdiv(a, b):
    return (a + b - 1) // b


def _vmem_limit_bytes():
    """Per-generation scoped-VMEM request: physical capacity minus ~25% headroom.

    v5e/v6e (128 MiB) -> ~96 MiB, v7x (64 MiB) -> ~48 MiB.  Falls back to a
    v7x-safe 48 MiB when the hardware query is unavailable.
    """
    cap = 64 * 1024 * 1024
    try:
        cap = int(pltpu.get_tpu_info().vmem_capacity_bytes)
    except Exception:
        pass
    return (cap * 3) // 4


# --------------------------------------------------------------------------- kernels
def _agg_linear_kernel(a_ref, h_ref, wt_ref, b_ref, o_ref, acc_ref, *, apply_relu):
    """acc += A_tile @ H_tile (f32 acc); at last k: out = acc @ Wt + b [+ ReLU]."""
    k = pl.program_id(1)

    @pl.when(k == 0)
    def _init():
        acc_ref[...] = jnp.zeros_like(acc_ref)

    acc_ref[...] += jnp.dot(a_ref[...], h_ref[...],
                            preferred_element_type=jnp.float32)

    @pl.when(k == pl.num_programs(1) - 1)
    def _finalize():
        out = jnp.dot(acc_ref[...].astype(wt_ref.dtype), wt_ref[...],
                      preferred_element_type=jnp.float32) + b_ref[...]
        if apply_relu:
            out = jnp.maximum(out, 0.0)
        o_ref[...] = out.astype(o_ref.dtype)


def _agg_bias_kernel(a_ref, hw_ref, b_ref, o_ref, acc_ref, *, apply_relu):
    """Reassociated path: acc += A_tile @ (H@Wt)_tile; at last k: out = acc + b [+ReLU]."""
    k = pl.program_id(1)

    @pl.when(k == 0)
    def _init():
        acc_ref[...] = jnp.zeros_like(acc_ref)

    acc_ref[...] += jnp.dot(a_ref[...], hw_ref[...],
                            preferred_element_type=jnp.float32)

    @pl.when(k == pl.num_programs(1) - 1)
    def _finalize():
        out = acc_ref[...] + b_ref[...]
        if apply_relu:
            out = jnp.maximum(out, 0.0)
        o_ref[...] = out.astype(o_ref.dtype)


# ----------------------------------------------------------------------- layer driver
def gcn_layer(adj, h_pad, wt_pad, b_pad, *, apply_relu, out_dtype,
              tm_max=512, budget_bytes=None):
    """One GCNSampling layer: mean aggregation (A @ H) + NodeUpdate linear [+ ReLU].

    adj    : [n_dst, n_src] row-normalized dense block adjacency (float)
    h_pad  : [S, in_pad]    bf16 source activations, S >= n_src, features padded to 128.
             Rows >= n_src may hold garbage (previous layer's row padding); they are
             cancelled by zero-padded adjacency columns.
    wt_pad : [in_pad, out_pad] bf16 pre-transposed, zero-padded linear weight
    b_pad  : [1, out_pad]   f32 zero-padded bias
    Returns [n_dst_pad, out_pad] (row/feature padded; slice only at the very end).
    """
    n_dst, n_src = adj.shape
    S, in_pad = h_pad.shape
    assert S >= n_src
    assert wt_pad.shape[0] == in_pad
    out_pad = wt_pad.shape[1]

    BF16, F32 = 2, 4
    out_size = jnp.dtype(out_dtype).itemsize

    vmem_limit = _vmem_limit_bytes()
    budget = (vmem_limit * 17) // 20 if budget_bytes is None else int(budget_bytes)

    # Reassociate to A @ (H @ Wt) when the projection narrows the features: smaller
    # streamed operand + accumulator, and no per-dst-tile weight matmul.
    reassociate = out_pad < in_pad
    rhs_cols = out_pad if reassociate else in_pad
    acc_cols = rhs_cols

    # ---- dst (parallel) tile: multiple of 16 (bf16 sublane packing).  Split a
    # single-tile dst axis in two so v7x's second TensorCore gets work.
    tm = min(tm_max, _round_up(n_dst, 16))
    if _round_up(n_dst, tm) == tm and n_dst > 16:
        tm = _round_up(_cdiv(n_dst, 2), 16)

    def fixed_cost(tm_):
        c = b_pad.size * F32 * 2                    # bias (assume double-buffered)
        if not reassociate:
            c += wt_pad.size * BF16 * 2             # resident weight (worst case)
        c += 2 * tm_ * out_pad * out_size           # double-buffered output tile
        c += tm_ * acc_cols * F32                   # f32 accumulator scratch
        return c

    while tm > 16 and fixed_cost(tm) + 2 * 128 * (tm + rhs_cols) * BF16 > budget:
        tm = _round_up(tm // 2, 16)
    n_dst_pad = _round_up(n_dst, tm)
    fixed = fixed_cost(tm)

    # ---- src (reduction) tile: keep the RHS fully VMEM-resident when it fits (fetched
    # once, never re-streamed per dst tile); otherwise stream 128-multiple chunks.
    resident = fixed + S * rhs_cols * BF16 + 2 * tm * S * BF16 <= budget
    if resident:
        tk = S
        n_src_pad = S
    else:
        avail = budget - fixed
        tk = (avail // (2 * BF16 * (tm + rhs_cols))) // 128 * 128
        tk = min(tk, _round_up(S, 128))
        if tk < 128:
            # TODO(synk): add an out_pad (N) tiling axis instead of failing here.
            raise ValueError(
                f"GCN layer does not fit VMEM (tm={tm}, in_pad={in_pad}, "
                f"out_pad={out_pad}, budget={budget}); needs N-tiling.")
        n_src_pad = _round_up(S, tk)

    grid = (n_dst_pad // tm, n_src_pad // tk)

    # ---- operands: bf16 streams, zero padding keeps padded rows/cols inert.
    adj_p = jnp.pad(adj.astype(jnp.bfloat16),
                    ((0, n_dst_pad - n_dst), (0, n_src_pad - n_src)))
    if reassociate:
        # Small projection done once; bias is still added after aggregation inside the
        # kernel (exact since (A H) Wt == A (H Wt)).
        rhs = jnp.dot(h_pad, wt_pad,
                      preferred_element_type=jnp.float32).astype(jnp.bfloat16)
    else:
        rhs = h_pad
    if n_src_pad > S:                               # only in the streamed-k fallback
        rhs = jnp.pad(rhs, ((0, n_src_pad - S), (0, 0)))

    # Advisory cost estimate (accounts for RHS re-streaming when it is not resident).
    flops = 2 * n_dst_pad * n_src_pad * rhs_cols
    rhs_reads = 1 if resident else grid[0]
    bytes_accessed = (adj_p.size * BF16 + rhs.size * BF16 * rhs_reads
                      + b_pad.size * F32 + n_dst_pad * out_pad * out_size)
    if reassociate:
        flops += 2 * S * in_pad * out_pad
        bytes_accessed += h_pad.size * BF16 + wt_pad.size * BF16 + rhs.size * BF16
    else:
        flops += 2 * n_dst_pad * in_pad * out_pad
        bytes_accessed += wt_pad.size * BF16
    cost = pl.CostEstimate(flops=int(flops), transcendentals=0,
                           bytes_accessed=int(bytes_accessed))

    def run(single_buffer_const):
        const_mode = ({"pipeline_mode": pl.Buffered(1)} if single_buffer_const else {})
        rhs_mode = const_mode if grid[1] == 1 else {}
        if reassociate:
            kernel = functools.partial(_agg_bias_kernel, apply_relu=apply_relu)
            in_specs = [
                pl.BlockSpec((tm, tk), lambda i, k: (i, k)),                    # adj
                pl.BlockSpec((tk, out_pad), lambda i, k: (k, 0), **rhs_mode),   # H@Wt
                pl.BlockSpec((1, out_pad), lambda i, k: (0, 0), **const_mode),  # bias
            ]
            operands = (adj_p, rhs, b_pad)
        else:
            kernel = functools.partial(_agg_linear_kernel, apply_relu=apply_relu)
            in_specs = [
                pl.BlockSpec((tm, tk), lambda i, k: (i, k)),                    # adj
                pl.BlockSpec((tk, in_pad), lambda i, k: (k, 0), **rhs_mode),    # H
                pl.BlockSpec((in_pad, out_pad), lambda i, k: (0, 0), **const_mode),  # Wt
                pl.BlockSpec((1, out_pad), lambda i, k: (0, 0), **const_mode),  # bias
            ]
            operands = (adj_p, rhs, wt_pad, b_pad)

        return pl.pallas_call(
            kernel,
            out_shape=jax.ShapeDtypeStruct((n_dst_pad, out_pad), out_dtype),
            grid_spec=pltpu.PrefetchScalarGridSpec(
                num_scalar_prefetch=0,
                grid=grid,
                in_specs=in_specs,
                out_specs=pl.BlockSpec((tm, out_pad), lambda i, k: (i, 0)),
                scratch_shapes=[pltpu.VMEM((tm, acc_cols), jnp.float32)],
            ),
            compiler_params=pltpu.CompilerParams(
                dimension_semantics=("parallel", "arbitrary"),
                vmem_limit_bytes=int(vmem_limit),
            ),
            cost_estimate=cost,
        )(*operands)

    # pl.Buffered(1) on constant-index operands halves their VMEM footprint; fall back
    # to default double-buffering if this jax build rejects pipeline_mode.
    try:
        return run(True)
    except Exception:
        return run(False)


# ------------------------------------------------------------------------------ model
class GCNSamplingPallas:
    """JAX/Pallas port of GCNSampling (dropout=0 -> torch module's dropout is None)."""

    def __init__(self, in_feats, n_hidden, n_classes, n_layers, dropout=0.0, key=None):
        # TODO(synk): training-time dropout (p != 0) not implemented; dropout=0 matches
        # the torch constructor branch where self.dropout is None.
        assert dropout == 0.0
        if key is None:
            key = jax.random.PRNGKey(0)

        dims = [(in_feats, n_hidden)]
        dims += [(n_hidden, n_hidden) for _ in range(1, n_layers)]
        dims += [(n_hidden, n_classes)]

        self.in_feats = in_feats
        self.n_classes = n_classes
        self.params = []
        for (fi, fo) in dims:
            key, kw, kb = jax.random.split(key, 3)
            bound = 1.0 / float(fi) ** 0.5
            w = jax.random.uniform(kw, (fo, fi), jnp.float32, -bound, bound)
            b = jax.random.uniform(kb, (fo,), jnp.float32, -bound, bound)
            fi_pad = _round_up(fi, 128)
            fo_pad = _round_up(fo, 128)
            wt_pad = (jnp.zeros((fi_pad, fo_pad), jnp.float32)
                      .at[:fi, :fo].set(w.T).astype(jnp.bfloat16))
            b_pad = jnp.zeros((1, fo_pad), jnp.float32).at[0, :fo].set(b)
            self.params.append(dict(w=w, b=b, wt_pad=wt_pad, b_pad=b_pad,
                                    in_feats=fi, out_feats=fo))

    def __call__(self, features, blocks):
        """features: [N0, in_feats]; blocks[i]: [N_{i+1}, N_i] row-normalized dense."""
        assert len(blocks) == len(self.params)
        n0, fi0 = features.shape
        in_pad0 = self.params[0]["wt_pad"].shape[0]
        # Pad + cast activations once at entry; keep them row/feature padded and bf16
        # across layers, slicing only at the very end.
        h = jnp.pad(features.astype(jnp.bfloat16),
                    ((0, _round_up(n0, 16) - n0), (0, in_pad0 - fi0)))
        n = len(self.params)
        for i, p in enumerate(self.params):
            last = i == n - 1
            h = gcn_layer(blocks[i], h, p["wt_pad"], p["b_pad"],
                          apply_relu=not last,
                          out_dtype=jnp.float32 if last else jnp.bfloat16)
        return h[:blocks[-1].shape[0], :self.n_classes]


def _reference_forward(model, features, blocks):
    h = features
    n = len(model.params)
    for i, p in enumerate(model.params):
        h = blocks[i] @ h
        h = h @ p["w"].T + p["b"]
        if i < n - 1:
            h = jnp.maximum(h, 0.0)
    return h


if __name__ == "__main__":
    key = jax.random.PRNGKey(0)

    in_feats, n_hidden, n_classes, n_layers = 16, 256, 8, 2
    node_counts = [64, 32, 16, 8]          # NodeFlow node layers (n_layers+1 blocks)

    key, kf = jax.random.split(key)
    features = jax.random.normal(kf, (node_counts[0], in_feats), jnp.float32)

    blocks = []
    for i in range(len(node_counts) - 1):
        key, ka = jax.random.split(key)
        n_dst, n_src = node_counts[i + 1], node_counts[i]
        adj = jax.random.bernoulli(ka, 0.3, (n_dst, n_src)).astype(jnp.float32)
        adj = adj.at[:, 0].set(1.0)                      # guarantee deg(v) >= 1
        adj = adj / jnp.sum(adj, axis=1, keepdims=True)  # mean aggregation
        blocks.append(adj)

    model = GCNSamplingPallas(in_feats, n_hidden, n_classes, n_layers,
                              dropout=0.0, key=jax.random.PRNGKey(42))

    out = jax.block_until_ready(model(features, blocks))
    ref = _reference_forward(model, features, blocks)
    assert out.shape == (node_counts[-1], n_classes)
    assert jnp.allclose(out, ref, atol=3e-2, rtol=3e-2), \
        float(jnp.max(jnp.abs(out - ref)))

    # Exercise the streamed-k / multi-dst-tile fallback (RHS too large for the small
    # forced budget -> grid_k > 1, grid_i > 1) against plain XLA.
    kd, ka, kw2, kb2 = jax.random.split(jax.random.PRNGKey(7), 4)
    n_dst2, n_src2, fi2, fo2 = 160, 1024, 384, 512
    h2 = jax.random.normal(kd, (n_src2, fi2), jnp.float32)
    adj2 = jax.random.bernoulli(ka, 0.05, (n_dst2, n_src2)).astype(jnp.float32)
    adj2 = adj2.at[:, 0].set(1.0)
    adj2 = adj2 / jnp.sum(adj2, axis=1, keepdims=True)
    w2 = jax.random.uniform(kw2, (fo2, fi2), jnp.float32, -0.05, 0.05)
    b2 = jax.random.uniform(kb2, (fo2,), jnp.float32, -0.05, 0.05)
    out2 = gcn_layer(adj2, h2.astype(jnp.bfloat16), w2.T.astype(jnp.bfloat16),
                     b2[None, :], apply_relu=True, out_dtype=jnp.float32,
                     budget_bytes=1_500_000)
    out2 = jax.block_until_ready(out2)[:n_dst2, :fo2]
    ref2 = jnp.maximum((adj2 @ h2) @ w2.T + b2, 0.0)
    assert jnp.allclose(out2, ref2, atol=3e-2, rtol=3e-2), \
        float(jnp.max(jnp.abs(out2 - ref2)))

    print("KERNEL_OK")
</pallas_src>

<mosaic_0001>
module attributes {stable_mosaic.version = 11 : i64} {
  func.func @_agg_linear_kernel(%arg0: i32, %arg1: i32, %arg2: memref<16x64xbf16, #tpu.memory_space<vmem>>, %arg3: memref<64x128xbf16, #tpu.memory_space<vmem>>, %arg4: memref<128x256xbf16, #tpu.memory_space<vmem>>, %arg5: memref<1x256xf32, #tpu.memory_space<vmem>>, %arg6: memref<16x256xbf16, #tpu.memory_space<vmem>>, %arg7: memref<16x128xf32, #tpu.memory_space<vmem>>) attributes {dimension_semantics = [#tpu.dimension_semantics<parallel>, #tpu.dimension_semantics<arbitrary>], iteration_bounds = array<i64: 2, 1>, scalar_prefetch = 0 : i64, scratch_operands = 1 : i64, tpu.core_type = #tpu.core_type<tc>, window_params = [{transform_indices = @transform_0, window_bounds = array<i64: 16, 64>}, {pipeline_mode = #tpu.pipeline_mode<synchronous>, transform_indices = @transform_1, window_bounds = array<i64: 64, 128>}, {pipeline_mode = #tpu.pipeline_mode<synchronous>, transform_indices = @transform_2, window_bounds = array<i64: 128, 256>}, {pipeline_mode = #tpu.pipeline_mode<synchronous>, transform_indices = @transform_3, window_bounds = array<i64: 1, 256>}, {transform_indices = @transform_4, window_bounds = array<i64: 16, 256>}]} {
    %c0_i32 = arith.constant 0 : i32
    %0 = arith.cmpi eq, %arg1, %c0_i32 : i32
    %1 = arith.extui %0 : i1 to i32
    %c0_i32_0 = arith.constant 0 : i32
    %2 = arith.cmpi ne, %1, %c0_i32_0 : i32
    scf.if %2 {
      %cst_10 = arith.constant 0.000000e+00 : f32
      %12 = vector.broadcast %cst_10 : f32 to vector<16x128xf32>
      %c0_11 = arith.constant 0 : index
      %c0_12 = arith.constant 0 : index
      %13 = vector.load %arg7[%c0_11, %c0_12] : memref<16x128xf32, #tpu.memory_space<vmem>>, vector<16x128xf32>
      tpu.vector_store %arg7[%c0_11, %c0_12], %12 {strides = array<i32>} : memref<16x128xf32, #tpu.memory_space<vmem>>, vector<16x128xf32>,
    } else {
    }
    %c0 = arith.constant 0 : index
    %c0_1 = arith.constant 0 : index
    %3 = vector.load %arg7[%c0, %c0_1] : memref<16x128xf32, #tpu.memory_space<vmem>>, vector<16x128xf32>
    %c0_2 = arith.constant 0 : index
    %c0_3 = arith.constant 0 : index
    %4 = vector.load %arg2[%c0_2, %c0_3] : memref<16x64xbf16, #tpu.memory_space<vmem>>, vector<16x64xbf16>
    %c0_4 = arith.constant 0 : index
    %c0_5 = arith.constant 0 : index
    %5 = vector.load %arg3[%c0_4, %c0_5] : memref<64x128xbf16, #tpu.memory_space<vmem>>, vector<64x128xbf16>
    %cst = arith.constant dense<0.000000e+00> : vector<16x128xf32>
    %6 = tpu.matmul %4, %5, %cst {dimension_numbers = #tpu.dot_dimension_numbers<[1], [0], [0], [1], [0, 0, 1, 1], [], []>} : vector<16x64xbf16>, vector<64x128xbf16>, vector<16x128xf32> -> vector<16x128xf32>
    %7 = arith.addf %3, %6 : vector<16x128xf32>
    %c0_6 = arith.constant 0 : index
    %c0_7 = arith.constant 0 : index
    %8 = vector.load %arg7[%c0_6, %c0_7] : memref<16x128xf32, #tpu.memory_space<vmem>>, vector<16x128xf32>
    tpu.vector_store %arg7[%c0_6, %c0_7], %7 {strides = array<i32>} : memref<16x128xf32, #tpu.memory_space<vmem>>, vector<16x128xf32>,
    %c0_i32_8 = arith.constant 0 : i32
    %9 = arith.cmpi eq, %arg1, %c0_i32_8 : i32
    %10 = arith.extui %9 : i1 to i32
    %c0_i32_9 = arith.constant 0 : i32
    %11 = arith.cmpi ne, %10, %c0_i32_9 : i32
    scf.if %11 {
      %c0_10 = arith.constant 0 : index
      %c0_11 = arith.constant 0 : index
      %12 = vector.load %arg7[%c0_10, %c0_11] : memref<16x128xf32, #tpu.memory_space<vmem>>, vector<16x128xf32>
      %13 = arith.truncf %12 : vector<16x128xf32> to vector<16x128xbf16>
      %c0_12 = arith.constant 0 : index
      %c0_13 = arith.constant 0 : index
      %14 = vector.load %arg4[%c0_12, %c0_13] : memref<128x256xbf16, #tpu.memory_space<vmem>>, vector<128x256xbf16>
      %cst_14 = arith.constant dense<0.000000e+00> : vector<16x256xf32>
      %15 = tpu.matmul %13, %14, %cst_14 {dimension_numbers = #tpu.dot_dimension_numbers<[1], [0], [0], [1], [0, 0, 1, 1], [], []>} : vector<16x128xbf16>, vector<128x256xbf16>, vector<16x256xf32> -> vector<16x256xf32>
      %c0_15 = arith.constant 0 : index
      %c0_16 = arith.constant 0 : index
      %16 = vector.load %arg5[%c0_15, %c0_16] : memref<1x256xf32, #tpu.memory_space<vmem>>, vector<1x256xf32>
      %17 = vector.broadcast %16 : vector<1x256xf32> to vector<16x256xf32>
      %18 = arith.addf %15, %17 : vector<16x256xf32>
      %cst_17 = arith.constant 0.000000e+00 : f32
      %19 = vector.broadcast %cst_17 : f32 to vector<16x256xf32>
      %20 = arith.maximumf %18, %19 : vector<16x256xf32>
      %21 = arith.truncf %20 : vector<16x256xf32> to vector<16x256xbf16>
      %c0_18 = arith.constant 0 : index
      %c0_19 = arith.constant 0 : index
      %22 = vector.load %arg6[%c0_18, %c0_19] : memref<16x256xbf16, #tpu.memory_space<vmem>>, vector<16x256xbf16>
      tpu.vector_store %arg6[%c0_18, %c0_19], %21 {strides = array<i32>} : memref<16x256xbf16, #tpu.memory_space<vmem>>, vector<16x256xbf16>,
    } else {
    }
    return
  }
  func.func @transform_0(%arg0: i32, %arg1: i32) -> (i32, i32) {
    %c0_i32 = arith.constant 0 : i32
    return %arg0, %arg1 : i32, i32
  }
  func.func @transform_1(%arg0: i32, %arg1: i32) -> (i32, i32) {
    %c0_i32 = arith.constant 0 : i32
    %c0_i32_0 = arith.constant 0 : i32
    return %arg1, %c0_i32 : i32, i32
  }
  func.func @transform_2(%arg0: i32, %arg1: i32) -> (i32, i32) {
    %c0_i32 = arith.constant 0 : i32
    %c0_i32_0 = arith.constant 0 : i32
    %c0_i32_1 = arith.constant 0 : i32
    return %c0_i32, %c0_i32_0 : i32, i32
  }
  func.func @transform_3(%arg0: i32, %arg1: i32) -> (i32, i32) {
    %c0_i32 = arith.constant 0 : i32
    %c0_i32_0 = arith.constant 0 : i32
    %c0_i32_1 = arith.constant 0 : i32
    return %c0_i32, %c0_i32_0 : i32, i32
  }
  func.func @transform_4(%arg0: i32, %arg1: i32) -> (i32, i32) {
    %c0_i32 = arith.constant 0 : i32
    %c0_i32_0 = arith.constant 0 : i32
    return %arg0, %c0_i32 : i32, i32
  }
}

module attributes {stable_mosaic.version = 11 : i64} {
  func.func @_agg_linear_kernel(%arg0: i32, %arg1: i32, %arg2: memref<16x64xbf16, #tpu.memory_space<vmem>>, %arg3: memref<64x128xbf16, #tpu.memory_space<vmem>>, %arg4: memref<128x256xbf16, #tpu.memory_space<vmem>>, %arg5: memref<1x256xf32, #tpu.memory_space<vmem>>, %arg6: memref<16x256xbf16, #tpu.memory_space<vmem>>, %arg7: memref<16x128xf32, #tpu.memory_space<vmem>>) attributes {dimension_semantics = [#tpu.dimension_semantics<parallel>, #tpu.dimension_semantics<arbitrary>], iteration_bounds = array<i64: 2, 1>, scalar_prefetch = 0 : i64, scratch_operands = 1 : i64, tpu.core_type = #tpu.core_type<tc>, window_params = [{transform_indices = @transform_0, window_bounds = array<i64: 16, 64>}, {transform_indices = @transform_1, window_bounds = array<i64: 64, 128>}, {pipeline_mode = #tpu.pipeline_mode<synchronous>, transform_indices = @transform_2, window_bounds = array<i64: 128, 256>}, {pipeline_mode = #tpu.pipeline_mode<synchronous>, transform_indices = @transform_3, window_bounds = array<i64: 1, 256>}, {transform_indices = @transform_4, window_bounds = array<i64: 16, 256>}]} {
    %c0_i32 = arith.constant 0 : i32
    %0 = arith.cmpi eq, %arg1, %c0_i32 : i32
    %1 = arith.extui %0 : i1 to i32
    %c0_i32_0 = arith.constant 0 : i32
    %2 = arith.cmpi ne, %1, %c0_i32_0 : i32
    scf.if %2 {
      %cst_10 = arith.constant 0.000000e+00 : f32
      %12 = vector.broadcast %cst_10 : f32 to vector<16x128xf32>
      %c0_11 = arith.constant 0 : index
      %c0_12 = arith.constant 0 : index
      %13 = vector.load %arg7[%c0_11, %c0_12] : memref<16x128xf32, #tpu.memory_space<vmem>>, vector<16x128xf32>
      tpu.vector_store %arg7[%c0_11, %c0_12], %12 {strides = array<i32>} : memref<16x128xf32, #tpu.memory_space<vmem>>, vector<16x128xf32>,
    } else {
    }
    %c0 = arith.constant 0 : index
    %c0_1 = arith.constant 0 : index
    %3 = vector.load %arg7[%c0, %c0_1] : memref<16x128xf32, #tpu.memory_space<vmem>>, vector<16x128xf32>
    %c0_2 = arith.constant 0 : index
    %c0_3 = arith.constant 0 : index
    %4 = vector.load %arg2[%c0_2, %c0_3] : memref<16x64xbf16, #tpu.memory_space<vmem>>, vector<16x64xbf16>
    %c0_4 = arith.constant 0 : index
    %c0_5 = arith.constant 0 : index
    %5 = vector.load %arg3[%c0_4, %c0_5] : memref<64x128xbf16, #tpu.memory_space<vmem>>, vector<64x128xbf16>
    %cst = arith.constant dense<0.000000e+00> : vector<16x128xf32>
    %6 = tpu.matmul %4, %5, %cst {dimension_numbers = #tpu.dot_dimension_numbers<[1], [0], [0], [1], [0, 0, 1, 1], [], []>} : vector<16x64xbf16>, vector<64x128xbf16>, vector<16x128xf32> -> vector<16x128xf32>
    %7 = arith.addf %3, %6 : vector<16x128xf32>
    %c0_6 = arith.constant 0 : index
    %c0_7 = arith.constant 0 : index
    %8 = vector.load %arg7[%c0_6, %c0_7] : memref<16x128xf32, #tpu.memory_space<vmem>>, vector<16x128xf32>
    tpu.vector_store %arg7[%c0_6, %c0_7], %7 {strides = array<i32>} : memref<16x128xf32, #tpu.memory_space<vmem>>, vector<16x128xf32>,
    %c0_i32_8 = arith.constant 0 : i32
    %9 = arith.cmpi eq, %arg1, %c0_i32_8 : i32
    %10 = arith.extui %9 : i1 to i32
    %c0_i32_9 = arith.constant 0 : i32
    %11 = arith.cmpi ne, %10, %c0_i32_9 : i32
    scf.if %11 {
      %c0_10 = arith.constant 0 : index
      %c0_11 = arith.constant 0 : index
      %12 = vector.load %arg7[%c0_10, %c0_11] : memref<16x128xf32, #tpu.memory_space<vmem>>, vector<16x128xf32>
      %13 = arith.truncf %12 : vector<16x128xf32> to vector<16x128xbf16>
      %c0_12 = arith.constant 0 : index
      %c0_13 = arith.constant 0 : index
      %14 = vector.load %arg4[%c0_12, %c0_13] : memref<128x256xbf16, #tpu.memory_space<vmem>>, vector<128x256xbf16>
      %cst_14 = arith.constant dense<0.000000e+00> : vector<16x256xf32>
      %15 = tpu.matmul %13, %14, %cst_14 {dimension_numbers = #tpu.dot_dimension_numbers<[1], [0], [0], [1], [0, 0, 1, 1], [], []>} : vector<16x128xbf16>, vector<128x256xbf16>, vector<16x256xf32> -> vector<16x256xf32>
      %c0_15 = arith.constant 0 : index
      %c0_16 = arith.constant 0 : index
      %16 = vector.load %arg5[%c0_15, %c0_16] : memref<1x256xf32, #tpu.memory_space<vmem>>, vector<1x256xf32>
      %17 = vector.broadcast %16 : vector<1x256xf32> to vector<16x256xf32>
      %18 = arith.addf %15, %17 : vector<16x256xf32>
      %cst_17 = arith.constant 0.000000e+00 : f32
      %19 = vector.broadcast %cst_17 : f32 to vector<16x256xf32>
      %20 = arith.maximumf %18, %19 : vector<16x256xf32>
      %21 = arith.truncf %20 : vector<16x256xf32> to vector<16x256xbf16>
      %c0_18 = arith.constant 0 : index
      %c0_19 = arith.constant 0 : index
      %22 = vector.load %arg6[%c0_18, %c0_19] : memref<16x256xbf16, #tpu.memory_space<vmem>>, vector<16x256xbf16>
      tpu.vector_store %arg6[%c0_18, %c0_19], %21 {strides = array<i32>} : memref<16x256xbf16, #tpu.memory_space<vmem>>, vector<16x256xbf16>,
    } else {
    }
    return
  }
  func.func @transform_0(%arg0: i32, %arg1: i32) -> (i32, i32) {
    %c0_i32 = arith.constant 0 : i32
    return %arg0, %arg1 : i32, i32
  }
  func.func @transform_1(%arg0: i32, %arg1: i32) -> (i32, i32) {
    %c0_i32 = arith.constant 0 : i32
    %c0_i32_0 = arith.constant 0 : i32
    return %arg1, %c0_i32 : i32, i32
  }
  func.func @transform_2(%arg0: i32, %arg1: i32) -> (i32, i32) {
    %c0_i32 = arith.constant 0 : i32
    %c0_i32_0 = arith.constant 0 : i32
    %c0_i32_1 = arith.constant 0 : i32
    return %c0_i32, %c0_i32_0 : i32, i32
  }
  func.func @transform_3(%arg0: i32, %arg1: i32) -> (i32, i32) {
    %c0_i32 = arith.constant 0 : i32
    %c0_i32_0 = arith.constant 0 : i32
    %c0_i32_1 = arith.constant 0 : i32
    return %c0_i32, %c0_i32_0 : i32, i32
  }
  func.func @transform_4(%arg0: i32, %arg1: i32) -> (i32, i32) {
    %c0_i32 = arith.constant 0 : i32
    %c0_i32_0 = arith.constant 0 : i32
    return %arg0, %c0_i32 : i32, i32
  }
}

</mosaic_0001>

<llo_original>
// kernel: tpu_custom_call.1
$region0: #{tpu_custom_call.1}
  #allocation0 [shape = 'u32[]', space=smem, size = 0x4, offset = 0x4, fixed_abs, tag = 'smem constant byte address 0x4 - core index']
  #allocation1 [shape = 'u32[144,128]{1,0:T(1,128)}', space=vmem, size = 0x12000, scoped, tag = 'internal scratch']
  #allocation2 [shape = 'f32[16,128]{1,0:T(8,128)}', space=vmem, size = 0x2000, scoped, tag = 'scratch operand']
  %s0 = inlined_call_operand.hbm [shape: bf16[32,64], index: 0, kind: input, shape index: {}]
  %s1 = inlined_call_operand.hbm [shape: bf16[64,128], index: 1, kind: input, shape index: {}]
  %s2 = inlined_call_operand.hbm [shape: bf16[128,256], index: 2, kind: input, shape index: {}]
  %s3 = inlined_call_operand.vmem [shape: f32[1,256], index: 3, kind: input, shape index: {}]
  %s4 = inlined_call_operand.hbm [shape: bf16[32,256], index: 4, kind: output, shape index: {}]
  %s5 = sld [smem:[#allocation0]]
  $region69: #{tpu_custom_call.1} parent=0
    _
  %s7 = ssub.s32 1, %s5
  %s8 = scalar_select 0, %s7, %s5
  $region1: #{tpu_custom_call.1} parent=0
    #allocation3 [shape = 'u8[8192]{0}', space=vmem, size = 0x2000, scoped, tag = 'input window, operand 0']
    #allocation4 [shape = 's32[2]{0}', space=sflag, size = 0x8, scoped, tag = 'scoped memory for tpu_custom_call.1']
    #allocation5 [shape = 's32[2]{0}', space=sflag, size = 0x8, scoped, tag = 'scoped memory for tpu_custom_call.1']
    #allocation6 [shape = 'u8[16384]{0}', space=vmem, size = 0x4000, scoped, tag = 'input window, operand 1, single buffered']
    #allocation7 [shape = 's32[1]{0}', space=sflag, size = 0x4, scoped, tag = 'scoped memory for tpu_custom_call.1']
    #allocation8 [shape = 'u8[65536]{0}', space=vmem, size = 0x10000, scoped, tag = 'input window, operand 2, single buffered']
    #allocation9 [shape = 'u8[16384]{0}', space=vmem, size = 0x4000, scoped, tag = 'output window, operand 0']
    %9 = vsyncpa [#allocation4], 0
    %s10 = scalar_lea.sflag [#allocation4], 1
    %11 = vsyncpa %s10, 0
    %12 = vsyncpa [#allocation7], 0
    %13 = vsyncpa [#allocation5], 0
    %s14 = scalar_lea.sflag [#allocation5], 1
    %15 = vsyncpa %s14, 0
    loop: start=0, step=1, limit=4
    $region2: #{tpu_custom_call.1} parent=1 // loop_pre_header
      _
    $region3: #{tpu_custom_call.1} parent=1 // loop_header
      %s17 = sphi 0, %s21
      %p18 = scmp.ge.s32.totalorder %s17, 4
      %s24 = sphi 0, %s36
      %s25 = sphi 0, %s32
      %s26 = sphi 0, %s24
      %s27 = sphi 0, %s25
      %s28 = sphi 0, %s26
      %s29 = sphi 0, %s27
      %s41 = sphi 0, %s43
      %s44 = sphi 0, %s41
      %s45 = sphi 0, %s44
      %s61 = sphi 0, %s45
      %s67 = sphi 0, %s69
      %s70 = sphi 0, %s67
      %s71 = sphi 0, %s70
      %s87 = sphi 0, %s71
      %s91 = sphi 0, %s91
      %s93 = sphi 0, %s91
      %s94 = sphi 0, %s93
      %s108 = sphi 0, %s94
      %s112 = sphi 0, %s112
      %s114 = sphi 0, %s112
      %s115 = sphi 0, %s114
      %s129 = sphi 0, %s115
      %s135 = sphi 0, %s137
      %s138 = sphi 0, %s135
      %s139 = sphi 0, %s138
      %s155 = sphi 0, %s139
    $region4: #{tpu_custom_call.1} parent=1 // loop_header_branch
      %20 = sbr.rel (%p18) target = $region8
    $region5: #{tpu_custom_call.1} parent=1 // loop_body
      %s22 = ssub.s32 %s17, 1
      %s23 = ssub.s32 %s17, 2
      %s30 = sadd.s32 1, %s25
      %p31 = scmp.ge.s32.totalorder %s30, 1
      %s32 = scalar_select %p31, 0, %s30
      %s33 = sadd.s32 1, %s24
      %s34 = scalar_select %p31, %s33, %s24
      %p35 = scmp.ge.s32.totalorder %s34, 2
      %s36 = scalar_select %p35, 0, %s34
      %s37 = ssub.s32 %s24, %s36
      %s38 = ssub.s32 %s25, %s32
      %s39 = sor.u32 %s37, %s38
      %p40 = scmp.eq.s32.totalorder %s39, 0
      %s42 = sadd.s32 %s41, 1
      %s43 = scalar_select %p40, %s41, %s42
      %p46 = pneg %p40
      %p47 = scmp.eq.s32.totalorder %s17, 1
      %p48 = por %p46, %p47
      %p49 = scmp.ne.s32.totalorder %s41, %s44
      %p50 = scmp.eq.s32.totalorder %s17, 0
      %p51 = por %p49, %p50
      %p52 = scmp.ne.s32.totalorder %s41, %s44
      %p53 = scmp.eq.s32.totalorder %s22, 1
      %p54 = por %p52, %p53
      %p55 = scmp.ne.s32.totalorder %s44, %s45
      %p56 = scmp.eq.s32.totalorder %s22, 0
      %p57 = por %p55, %p56
      %p58 = scmp.ne.s32.totalorder %s44, %s45
      %p59 = scmp.eq.s32.totalorder %s23, 1
      %p60 = por %p58, %p59
      %p62 = scmp.ne.s32.totalorder %s45, %s61
      %p63 = scmp.eq.s32.totalorder %s23, 0
      %p64 = por %p62, %p63
      %s65 = ssub.s32 %s25, %s32
      %p66 = scmp.eq.s32.totalorder %s65, 0
      %s68 = sadd.s32 %s67, 1
      %s69 = scalar_select %p66, %s67, %s68
      %p72 = pneg %p66
      %p73 = scmp.eq.s32.totalorder %s17, 1
      %p74 = por %p72, %p73
      %p75 = scmp.ne.s32.totalorder %s67, %s70
      %p76 = scmp.eq.s32.totalorder %s17, 0
      %p77 = por %p75, %p76
      %p78 = scmp.ne.s32.totalorder %s67, %s70
      %p79 = scmp.eq.s32.totalorder %s22, 1
      %p80 = por %p78, %p79
      %p81 = scmp.ne.s32.totalorder %s70, %s71
      %p82 = scmp.eq.s32.totalorder %s22, 0
      %p83 = por %p81, %p82
      %p84 = scmp.ne.s32.totalorder %s70, %s71
      %p85 = scmp.eq.s32.totalorder %s23, 1
      %p86 = por %p84, %p85
      %p88 = scmp.ne.s32.totalorder %s71, %s87
      %p89 = scmp.eq.s32.totalorder %s23, 0
      %p90 = por %p88, %p89
      %s92 = sadd.s32 %s91, 1
      %p95 = scmp.eq.s32.totalorder %s17, 1
      %p96 = scmp.ne.s32.totalorder %s91, %s93
      %p97 = scmp.eq.s32.totalorder %s17, 0
      %p98 = por %p96, %p97
      %p99 = scmp.ne.s32.totalorder %s91, %s93
      %p100 = scmp.eq.s32.totalorder %s22, 1
      %p101 = por %p99, %p100
      %p102 = scmp.ne.s32.totalorder %s93, %s94
      %p103 = scmp.eq.s32.totalorder %s22, 0
      %p104 = por %p102, %p103
      %p105 = scmp.ne.s32.totalorder %s93, %s94
      %p106 = scmp.eq.s32.totalorder %s23, 1
      %p107 = por %p105, %p106
      %p109 = scmp.ne.s32.totalorder %s94, %s108
      %p110 = scmp.eq.s32.totalorder %s23, 0
      %p111 = por %p109, %p110
      %s113 = sadd.s32 %s112, 1
      %p116 = scmp.eq.s32.totalorder %s17, 1
      %p117 = scmp.ne.s32.totalorder %s112, %s114
      %p118 = scmp.eq.s32.totalorder %s17, 0
      %p119 = por %p117, %p118
      %p120 = scmp.ne.s32.totalorder %s112, %s114
      %p121 = scmp.eq.s32.totalorder %s22, 1
      %p122 = por %p120, %p121
      %p123 = scmp.ne.s32.totalorder %s114, %s115
      %p124 = scmp.eq.s32.totalorder %s22, 0
      %p125 = por %p123, %p124
      %p126 = scmp.ne.s32.totalorder %s114, %s115
      %p127 = scmp.eq.s32.totalorder %s23, 1
      %p128 = por %p126, %p127
      %p130 = scmp.ne.s32.totalorder %s115, %s129
      %p131 = scmp.eq.s32.totalorder %s23, 0
      %p132 = por %p130, %p131
      %s133 = ssub.s32 %s24, %s36
      %p134 = scmp.eq.s32.totalorder %s133, 0
      %s136 = sadd.s32 %s135, 1
      %s137 = scalar_select %p134, %s135, %s136
      %p140 = pneg %p134
      %p141 = scmp.eq.s32.totalorder %s17, 1
      %p142 = por %p140, %p141
      %p143 = scmp.ne.s32.totalorder %s135, %s138
      %p144 = scmp.eq.s32.totalorder %s17, 0
      %p145 = por %p143, %p144
      %p146 = scmp.ne.s32.totalorder %s135, %s138
      %p147 = scmp.eq.s32.totalorder %s22, 1
      %p148 = por %p146, %p147
      %p149 = scmp.ne.s32.totalorder %s138, %s139
      %p150 = scmp.eq.s32.totalorder %s22, 0
      %p151 = por %p149, %p150
      %p152 = scmp.ne.s32.totalorder %s138, %s139
      %p153 = scmp.eq.s32.totalorder %s23, 1
      %p154 = por %p152, %p153
      %p156 = scmp.ne.s32.totalorder %s139, %s155
      %p157 = scmp.eq.s32.totalorder %s23, 0
      %p158 = por %p156, %p157
      %p159 = scmp.le.s32.totalorder 1, %s17
      %p160 = scmp.lt.s32.totalorder %s17, 3
      %p161 = pnand %p159, %p160
      %p162 = pneg %p161
      // Predicated region
      $region9: #{tpu_custom_call.1} parent=5 // pred_check
        _
      $region10: #{tpu_custom_call.1} parent=5 // pred_check_branch
        %164 = sbr.rel (%p161) target = $region12
      $region11: #{tpu_custom_call.1} parent=5 // pred_region
        %s165 = ssub.s32 %s17, 1
        // Predicated region
        $region13: #{tpu_custom_call.1} parent=11 // pred_check
          %p166 = pneg %p83
        $region14: #{tpu_custom_call.1} parent=11 // pred_check_branch
          %168 = sbr.rel (%p166) target = $region16
        $region15: #{tpu_custom_call.1} parent=11 // pred_region
          %s169 = smul.u32 8, %s27
          %s171 = ssub.s32 512, 512
          %172 = vsyncadd [#allocation7], %s171
          %s173 = smul.addr %s169, 64
          %s174 = scalar_lea.hbm %s1, %s173
          %s175 = sshll.u32 [#allocation6], 4
          %s176 = int_to_ptr.vmem [resolvable:$true] %s175
          %181 = dma.hbm_to_vmem [thread:$0]  %s174, 512, %s176, [#allocation7], 64, 64, 4
        $region16: #{tpu_custom_call.1} parent=11 // pred_fallthru
          _
        // Predicated region
        $region17: #{tpu_custom_call.1} parent=11 // pred_check
          %p182 = pneg %p104
        $region18: #{tpu_custom_call.1} parent=11 // pred_check_branch
          %184 = sbr.rel (%p182) target = $region20
        $region19: #{tpu_custom_call.1} parent=11 // pred_region
          %s186 = ssub.s32 2048, 2048
          %187 = vsyncadd [#allocation7], %s186
          %s188 = sshll.u32 [#allocation8], 4
          %s189 = int_to_ptr.vmem [resolvable:$true] %s188
          %194 = dma.hbm_to_vmem [thread:$0]  %s2, 2048, %s189, [#allocation7], 128, 128, 8
        $region20: #{tpu_custom_call.1} parent=11 // pred_fallthru
          _
        // Predicated region
        $region21: #{tpu_custom_call.1} parent=11 // pred_check
          %p195 = pneg %p125
        $region22: #{tpu_custom_call.1} parent=11 // pred_check_branch
          %197 = sbr.rel (%p195) target = $region24
        $region23: #{tpu_custom_call.1} parent=11 // pred_region
          _
        $region24: #{tpu_custom_call.1} parent=11 // pred_fallthru
          _
      $region12: #{tpu_custom_call.1} parent=5 // pred_fallthru
        _
      %p198 = scmp.lt.s32.totalorder %s17, 2
      // Predicated region
      $region25: #{tpu_custom_call.1} parent=5 // pred_check
        %p199 = pneg %p198
      $region26: #{tpu_custom_call.1} parent=5 // pred_check_branch
        %201 = sbr.rel (%p199) target = $region28
      $region27: #{tpu_custom_call.1} parent=5 // pred_region
        // Predicated region
        $region29: #{tpu_custom_call.1} parent=27 // pred_check
          %p202 = pneg %p51
        $region30: #{tpu_custom_call.1} parent=27 // pred_check_branch
          %204 = sbr.rel (%p202) target = $region32
        $region31: #{tpu_custom_call.1} parent=27 // pred_region
          %s205 = sand.u32 %s41, 1
          %s206 = scalar_lea.sflag [#allocation4], %s205
          %s207 = sand.u32 %s41, 1
          %s208 = smul.addr %s207, 8
          %s209 = scalar_lea.vmem [#allocation3], %s208
          %s210 = smul.u32 2, %s24
          %s212 = ssub.s32 128, 128
          %213 = vsyncadd %s206, %s212
          %s214 = sadd.s32 %s25, %s210
          %s215 = smul.addr %s214, 64
          %s216 = scalar_lea.hbm %s0, %s215
          %s217 = sshll.u32 %s209, 4
          %s218 = int_to_ptr.vmem [resolvable:$true] %s217
          %223 = dma.hbm_to_vmem [thread:$0]  %s216, 128, %s218, %s206, 64, 64, 4
        $region32: #{tpu_custom_call.1} parent=27 // pred_fallthru
          _
      $region28: #{tpu_custom_call.1} parent=5 // pred_fallthru
        _
      %p224 = scmp.le.s32.totalorder 1, %s17
      %p225 = scmp.lt.s32.totalorder %s17, 3
      %p226 = pnand %p224, %p225
      %p227 = pneg %p226
      // Predicated region
      $region33: #{tpu_custom_call.1} parent=5 // pred_check
        _
      $region34: #{tpu_custom_call.1} parent=5 // pred_check_branch
        %229 = sbr.rel (%p226) target = $region36
      $region35: #{tpu_custom_call.1} parent=5 // pred_region
        %s230 = ssub.s32 %s17, 1
        %s231 = sand.u32 %s44, 1
        %s232 = scalar_lea.sflag [#allocation4], %s231
        %s233 = sand.u32 %s44, 1
        %s234 = smul.addr %s233, 8
        %s235 = scalar_lea.vmem [#allocation3], %s234
        // Predicated region
        $region37: #{tpu_custom_call.1} parent=35 // pred_check
          %p236 = pneg %p57
        $region38: #{tpu_custom_call.1} parent=35 // pred_check_branch
          %238 = sbr.rel (%p236) target = $region40
        $region39: #{tpu_custom_call.1} parent=35 // pred_region
          %239 = dma.done %s232, 128
        $region40: #{tpu_custom_call.1} parent=35 // pred_fallthru
          _
        // Predicated region
        $region41: #{tpu_custom_call.1} parent=35 // pred_check
          %p240 = pneg %p83
        $region42: #{tpu_custom_call.1} parent=35 // pred_check_branch
          %242 = sbr.rel (%p240) target = $region44
        $region43: #{tpu_custom_call.1} parent=35 // pred_region
          %243 = dma.done [#allocation7], 512
        $region44: #{tpu_custom_call.1} parent=35 // pred_fallthru
          _
        // Predicated region
        $region45: #{tpu_custom_call.1} parent=35 // pred_check
          %p244 = pneg %p104
        $region46: #{tpu_custom_call.1} parent=35 // pred_check_branch
          %246 = sbr.rel (%p244) target = $region48
        $region47: #{tpu_custom_call.1} parent=35 // pred_region
          %247 = dma.done [#allocation7], 2048
        $region48: #{tpu_custom_call.1} parent=35 // pred_fallthru
          _
        %s248 = sand.u32 %s44, 1
        %s249 = scalar_lea.sflag [#allocation4], %s248
        %s250 = sand.u32 %s44, 1
        %s251 = smul.addr %s250, 8
        %s252 = scalar_lea.vmem [#allocation3], %s251
        %p253 = pneg %p57
        %p254 = pneg %p54
        %p255 = pneg %p83
        %p256 = pneg %p80
        %p257 = pneg %p104
        %p258 = pneg %p101
        %p259 = pneg %p125
        %p260 = pneg %p122
        %p261 = pneg %p151
        %p262 = pneg %p148
        %s263 = sand.u32 %s138, 1
        %s264 = scalar_lea.sflag [#allocation5], %s263
        %s265 = sand.u32 %s138, 1
        %s266 = smul.addr %s265, 16
        %s267 = scalar_lea.vmem [#allocation9], %s266
        %s268 = smul.u32 2, %s26
        %s269 = smul.u32 8, %s27
        %s270 = smul.u32 2, %s26
        %p272 = scmp.eq.s32.totalorder %s27, 0
        // Predicated region
        $region49: #{tpu_custom_call.1} parent=35 // pred_check
          %p273 = pneg %p272
        $region50: #{tpu_custom_call.1} parent=35 // pred_check_branch
          %275 = sbr.rel (%p273) target = $region52
        $region51: #{tpu_custom_call.1} parent=35 // pred_region
          %276 = vst [vmem:[#allocation2] sm:$0xff] 0.0
          %277 = vst [vmem:[#allocation2 + $0x8] sm:$0xff] 0.0
        $region52: #{tpu_custom_call.1} parent=35 // pred_fallthru
          _
        %v278 = vld [vmem:[#allocation2] sm:$0xff]
        %v279 = vld [vmem:[#allocation2 + $0x8] sm:$0xff]
        %v280 = vld [vmem:[%s235] sm:$0xf]
        %v281 = vld [vmem:[%s235 + $0x4] sm:$0xf]
        %v282 = vld [vmem:[#allocation6] sm:$0xf]
        %v283 = vld [vmem:[#allocation6 + $0x4] sm:$0xf]
        %v284 = vld [vmem:[#allocation6 + $0x8] sm:$0xf]
        %v285 = vld [vmem:[#allocation6 + $0xc] sm:$0xf]
        %v286 = vld [vmem:[#allocation6 + $0x10] sm:$0xf]
        %v287 = vld [vmem:[#allocation6 + $0x14] sm:$0xf]
        %v288 = vld [vmem:[#allocation6 + $0x18] sm:$0xf]
        %v289 = vld [vmem:[#allocation6 + $0x1c] sm:$0xf]
        %v292 = vunpack.c.l.b16 %v280
        %v293 = vunpack.c.l.b16 %v281
        %v294 = vpack.c.b16 %v293, %v292
        %v303 = vunpack.c.l.b16 %v282
        %v304 = vunpack.c.l.b16 %v283
        %v305 = vunpack.c.l.b16 %v284
        %v306 = vunpack.c.l.b16 %v285
        %v307 = vunpack.c.l.b16 %v286
        %v308 = vunpack.c.l.b16 %v287
        %v309 = vunpack.c.l.b16 %v288
        %v310 = vunpack.c.l.b16 %v289
        %v311 = vpack.c.b16 %v304, %v303
        %v312 = vpack.c.b16 %v306, %v305
        %v313 = vpack.c.b16 %v308, %v307
        %v314 = vpack.c.b16 %v310, %v309
        %vm319 = vcmask 523264
        %v321 = vsel %vm319, %v294, 0
        %323 = vmatprep.subr.bf16.mxu0 0
        %324 = vmatpush1.bf16.msra.mxu0 %v311
        %325 = vmatprep.subr.bf16.mxu0 0
        %326 = vmatpush1.bf16.msra.mxu0 %v312
        %327 = vmatprep.subr.bf16.mxu0 0
        %328 = vmatpush1.bf16.msra.mxu0 %v313
        %329 = vmatprep.subr.bf16.mxu0 0
        %330 = vmatpush1.bf16.msra.mxu0 %v314
        %331 = vmatprep.subr.bf16.mxu0 0
        %332 = vmatpush1.bf16.msra.mxu0 0
        %333 = vmatprep.subr.bf16.mxu0 0
        %334 = vmatpush1.bf16.msra.mxu0 0
        %335 = vmatprep.subr.bf16.mxu0 0
        %336 = vmatpush1.bf16.msra.mxu0 0
        %337 = vmatprep.subr.bf16.mxu0 0
        %338 = vmatpush1.bf16.msra.mxu0 0
        %339 = vmatprep.subr.bf16.mxu0 0
        %340 = vmatpush1.bf16.msra.mxu0 0
        %341 = vmatprep.subr.bf16.mxu0 0
        %342 = vmatpush1.bf16.msra.mxu0 0
        %343 = vmatprep.subr.bf16.mxu0 0
        %344 = vmatpush1.bf16.msra.mxu0 0
        %345 = vmatprep.subr.bf16.mxu0 0
        %346 = vmatpush1.bf16.msra.mxu0 0
        %347 = vmatprep.subr.bf16.mxu0 0
        %348 = vmatpush1.bf16.msra.mxu0 0
        %349 = vmatprep.subr.bf16.mxu0 0
        %350 = vmatpush1.bf16.msra.mxu0 0
        %351 = vmatprep.subr.bf16.mxu0 0
        %352 = vmatpush1.bf16.msra.mxu0 0
        %353 = vmatprep.subr.bf16.mxu0 0
        %354 = vmatpush1.bf16.msra.mxu0 0
        %355 = vmatprep.mubr.bf16.mxu0 0
        %356 = vmatmul.mubr.bf16.gmra.mrb[0].mxu0 %v321
        %v357 = vpop.f32.mrb[0].mxu0
        %v358 = vadd.f32 0.0, %v357
        %v359 = vpop.f32.mrb[0].mxu0
        %v360 = vpop.f32.mrb[0].mxu0
        %v361 = vadd.f32 0.0, %v360
        %v362 = vpop.f32.mrb[0].mxu0
        %363 = vdwg.mxu0
        %v364 = vadd.f32 %v278, %v358
        %v365 = vadd.f32 %v279, %v361
        %366 = vst [vmem:[#allocation2] sm:$0xff] %v364
        %367 = vst [vmem:[#allocation2 + $0x8] sm:$0xff] %v365
        // Predicated region
        $region53: #{tpu_custom_call.1} parent=35 // pred_check
          %p368 = pneg %p272
        $region54: #{tpu_custom_call.1} parent=35 // pred_check_branch
          %370 = sbr.rel (%p368) target = $region56
        $region55: #{tpu_custom_call.1} parent=35 // pred_region
          %v371 = vld [vmem:[#allocation2] sm:$0xff]
          %v372 = vld [vmem:[#allocation2 + $0x8] sm:$0xff]
          %v373 = vpack.c.bf16 %v372, %v371
          %v374 = vld [vmem:[#allocation8] sm:$0xff]
          %v375 = vld [vmem:[#allocation8 + $0x8] sm:$0xff]
          %v376 = vld [vmem:[#allocation8 + $0x10] sm:$0xff]
          %v377 = vld [vmem:[#allocation8 + $0x18] sm:$0xff]
          %v378 = vld [vmem:[#allocation8 + $0x20] sm:$0xff]
          %v379 = vld [vmem:[#allocation8 + $0x28] sm:$0xff]
          %v380 = vld [vmem:[#allocation8 + $0x30] sm:$0xff]
          %v381 = vld [vmem:[#allocation8 + $0x38] sm:$0xff]
          %v382 = vld [vmem:[#allocation8 + $0x40] sm:$0xff]
          %v383 = vld [vmem:[#allocation8 + $0x48] sm:$0xff]
          %v384 = vld [vmem:[#allocation8 + $0x50] sm:$0xff]
          %v385 = vld [vmem:[#allocation8 + $0x58] sm:$0xff]
          %v386 = vld [vmem:[#allocation8 + $0x60] sm:$0xff]
          %v387 = vld [vmem:[#allocation8 + $0x68] sm:$0xff]
          %v388 = vld [vmem:[#allocation8 + $0x70] sm:$0xff]
          %v389 = vld [vmem:[#allocation8 + $0x78] sm:$0xff]
          %v390 = vld [vmem:[%s3] sm:$0x3]
          %v392 = vlaneseq
          %v393 = vshrl.u32 %v392, 7
          %v394 = vsub.s32 0, %v393
          %v395 = vrot.slane %v390, %v394
          %v396 = vlaneseq
          %v397 = vshrl.u32 %v396, 7
          %v398 = vsub.s32 1, %v397
          %v399 = vrot.slane %v390, %v398
          %v418 = vunpack.c.l.b16 %v374
          %v419 = vunpack.c.h.b16 %v374
          %v420 = vunpack.c.l.b16 %v375
          %v421 = vunpack.c.h.b16 %v375
          %v422 = vunpack.c.l.b16 %v376
          %v423 = vunpack.c.h.b16 %v376
          %v424 = vunpack.c.l.b16 %v377
          %v425 = vunpack.c.h.b16 %v377
          %v426 = vunpack.c.l.b16 %v378
          %v427 = vunpack.c.h.b16 %v378
          %v428 = vunpack.c.l.b16 %v379
          %v429 = vunpack.c.h.b16 %v379
          %v430 = vunpack.c.l.b16 %v380
          %v431 = vunpack.c.h.b16 %v380
          %v432 = vunpack.c.l.b16 %v381
          %v433 = vunpack.c.h.b16 %v381
          %v434 = vunpack.c.l.b16 %v382
          %v435 = vunpack.c.h.b16 %v382
          %v436 = vunpack.c.l.b16 %v383
          %v437 = vunpack.c.h.b16 %v383
          %v438 = vunpack.c.l.b16 %v384
          %v439 = vunpack.c.h.b16 %v384
          %v440 = vunpack.c.l.b16 %v385
          %v441 = vunpack.c.h.b16 %v385
          %v442 = vunpack.c.l.b16 %v386
          %v443 = vunpack.c.h.b16 %v386
          %v444 = vunpack.c.l.b16 %v387
          %v445 = vunpack.c.h.b16 %v387
          %v446 = vunpack.c.l.b16 %v388
          %v447 = vunpack.c.h.b16 %v388
          %v448 = vunpack.c.l.b16 %v389
          %v449 = vunpack.c.h.b16 %v389
          %v450 = vpack.c.b16 %v420, %v418
          %v451 = vpack.c.b16 %v421, %v419
          %v452 = vpack.c.b16 %v424, %v422
          %v453 = vpack.c.b16 %v425, %v423
          %v454 = vpack.c.b16 %v428, %v426
          %v455 = vpack.c.b16 %v429, %v427
          %v456 = vpack.c.b16 %v432, %v430
          %v457 = vpack.c.b16 %v433, %v431
          %v458 = vpack.c.b16 %v436, %v434
          %v459 = vpack.c.b16 %v437, %v435
          %v460 = vpack.c.b16 %v440, %v438
          %v461 = vpack.c.b16 %v441, %v439
          %v462 = vpack.c.b16 %v444, %v442
          %v463 = vpack.c.b16 %v445, %v443
          %v464 = vpack.c.b16 %v448, %v446
          %v465 = vpack.c.b16 %v449, %v447
          %482 = vmatprep.subr.bf16.mxu0 %v451
          %483 = vmatpush1.bf16.msra.mxu0 %v450
          %484 = vmatprep.subr.bf16.mxu0 %v453
          %485 = vmatpush1.bf16.msra.mxu0 %v452
          %486 = vmatprep.subr.bf16.mxu0 %v455
          %487 = vmatpush1.bf16.msra.mxu0 %v454
          %488 = vmatprep.subr.bf16.mxu0 %v457
          %489 = vmatpush1.bf16.msra.mxu0 %v456
          %490 = vmatprep.subr.bf16.mxu0 %v459
          %491 = vmatpush1.bf16.msra.mxu0 %v458
          %492 = vmatprep.subr.bf16.mxu0 %v461
          %493 = vmatpush1.bf16.msra.mxu0 %v460
          %494 = vmatprep.subr.bf16.mxu0 %v463
          %495 = vmatpush1.bf16.msra.mxu0 %v462
          %496 = vmatprep.subr.bf16.mxu0 %v465
          %497 = vmatpush1.bf16.msra.mxu0 %v464
          %498 = vmatprep.subr.bf16.mxu0 0
          %499 = vmatpush1.bf16.msra.mxu0 0
          %500 = vmatprep.subr.bf16.mxu0 0
          %501 = vmatpush1.bf16.msra.mxu0 0
          %502 = vmatprep.subr.bf16.mxu0 0
          %503 = vmatpush1.bf16.msra.mxu0 0
          %504 = vmatprep.subr.bf16.mxu0 0
          %505 = vmatpush1.bf16.msra.mxu0 0
          %506 = vmatprep.subr.bf16.mxu0 0
          %507 = vmatpush1.bf16.msra.mxu0 0
          %508 = vmatprep.subr.bf16.mxu0 0
          %509 = vmatpush1.bf16.msra.mxu0 0
          %510 = vmatprep.subr.bf16.mxu0 0
          %511 = vmatpush1.bf16.msra.mxu0 0
          %512 = vmatprep.subr.bf16.mxu0 0
          %513 = vmatpush1.bf16.msra.mxu0 0
          %514 = vmatprep.mubr.bf16.mxu0 0
          %515 = vmatmul.mubr.bf16.gmra.mrb[0].mxu0 %v373
          %v516 = vpop.f32.mrb[0].mxu0
          %v517 = vadd.f32 %v395, %v516
          %v518 = vpop.f32.mrb[0].mxu0
          %v519 = vadd.f32 %v399, %v518
          %v520 = vpop.f32.mrb[0].mxu0
          %v521 = vadd.f32 %v395, %v520
          %v522 = vpop.f32.mrb[0].mxu0
          %v523 = vadd.f32 %v399, %v522
          %524 = vdwg.mxu0
          %v525 = vmax.f32 %v517, 0.0
          %v526 = vmax.f32 %v519, 0.0
          %v527 = vmax.f32 %v521, 0.0
          %v528 = vmax.f32 %v523, 0.0
          %v529 = vpack.c.bf16 %v527, %v525
          %v530 = vpack.c.bf16 %v528, %v526
          %v533 = vunpack.c.l.b16 %v529
          %v534 = vunpack.c.l.b16 %v530
          %v535 = vunpack.c.h.b16 %v529
          %v536 = vunpack.c.h.b16 %v530
          %v537 = vpack.c.b16 %v534, %v533
          %v538 = vpack.c.b16 %v536, %v535
          %541 = vst [vmem:[%s267] sm:$0xff] %v537
          %542 = vst [vmem:[%s267 + $0x8] sm:$0xff] %v538
        $region56: #{tpu_custom_call.1} parent=35 // pred_fallthru
          _
        %s543 = sand.u32 %s138, 1
        %s544 = scalar_lea.sflag [#allocation5], %s543
        %s545 = sand.u32 %s138, 1
        %s546 = smul.addr %s545, 16
        %s547 = scalar_lea.vmem [#allocation9], %s546
        // Predicated region
        $region57: #{tpu_custom_call.1} parent=35 // pred_check
          %p548 = pneg %p148
        $region58: #{tpu_custom_call.1} parent=35 // pred_check_branch
          %550 = sbr.rel (%p548) target = $region60
        $region59: #{tpu_custom_call.1} parent=35 // pred_region
          %s551 = smul.u32 2, %s26
          %s553 = ssub.s32 256, 256
          %554 = vsyncadd %s544, %s553
          %s555 = smul.addr %s551, 2
          %s556 = smul.addr %s555, 64
          %s557 = scalar_lea.hbm %s4, %s556
          %s558 = sshll.u32 %s547, 4
          %s559 = int_to_ptr.vmem [resolvable:$true] %s558
          %564 = dma.vmem_to_hbm [thread:$0]  %s559, 256, %s557, %s544, 128, 128, 8
        $region60: #{tpu_custom_call.1} parent=35 // pred_fallthru
          _
      $region36: #{tpu_custom_call.1} parent=5 // pred_fallthru
        _
      %p565 = scmp.le.s32.totalorder 2, %s17
      // Predicated region
      $region61: #{tpu_custom_call.1} parent=5 // pred_check
        %p566 = pneg %p565
      $region62: #{tpu_custom_call.1} parent=5 // pred_check_branch
        %568 = sbr.rel (%p566) target = $region64
      $region63: #{tpu_custom_call.1} parent=5 // pred_region
        %s569 = ssub.s32 %s17, 2
        // Predicated region
        $region65: #{tpu_custom_call.1} parent=63 // pred_check
          %p570 = pneg %p154
        $region66: #{tpu_custom_call.1} parent=63 // pred_check_branch
          %572 = sbr.rel (%p570) target = $region68
        $region67: #{tpu_custom_call.1} parent=63 // pred_region
          %s573 = sand.u32 %s139, 1
          %s574 = scalar_lea.sflag [#allocation5], %s573
          %s575 = sand.u32 %s139, 1
          %s576 = smul.addr %s575, 16
          %s577 = scalar_lea.vmem [#allocation9], %s576
          %578 = dma.done %s574, 256
        $region68: #{tpu_custom_call.1} parent=63 // pred_fallthru
          _
      $region64: #{tpu_custom_call.1} parent=5 // pred_fallthru
        _
    $region6: #{tpu_custom_call.1} parent=1 // loop_footer
      %s21 = sadd.s32 1, %s17
    $region7: #{tpu_custom_call.1} parent=1 // loop_footer_branch
      %16 = sbr.rel target = $region3
    $region8: #{tpu_custom_call.1} parent=1 // loop_exit
      _
    %579 = vsyncpa [#allocation4], 1
    %s580 = scalar_lea.sflag [#allocation4], 1
    %581 = vsyncpa %s580, 1
    %582 = vsyncpa [#allocation7], 1
    %583 = vsyncpa [#allocation5], 1
    %s584 = scalar_lea.sflag [#allocation5], 1
    %585 = vsyncpa %s584, 1

// kernel: tpu_custom_call.1
$region0: #{tpu_custom_call.1}
  #allocation0 [shape = 'u32[]', space=smem, size = 0x4, offset = 0x4, fixed_abs, tag = 'smem constant byte address 0x4 - core index']
  #allocation1 [shape = 'u32[144,128]{1,0:T(1,128)}', space=vmem, size = 0x12000, scoped, tag = 'internal scratch']
  #allocation2 [shape = 'f32[16,128]{1,0:T(8,128)}', space=vmem, size = 0x2000, scoped, tag = 'scratch operand']
  %s0 = inlined_call_operand.hbm [shape: bf16[32,64], index: 0, kind: input, shape index: {}]
  %s1 = inlined_call_operand.hbm [shape: bf16[64,128], index: 1, kind: input, shape index: {}]
  %s2 = inlined_call_operand.hbm [shape: bf16[128,256], index: 2, kind: input, shape index: {}]
  %s3 = inlined_call_operand.vmem [shape: f32[1,256], index: 3, kind: input, shape index: {}]
  %s4 = inlined_call_operand.hbm [shape: bf16[32,256], index: 4, kind: output, shape index: {}]
  %s5 = sld [smem:[#allocation0]]
  $region69: #{tpu_custom_call.1} parent=0
    _
  %s7 = ssub.s32 1, %s5
  %s8 = scalar_select 0, %s7, %s5
  $region1: #{tpu_custom_call.1} parent=0
    #allocation3 [shape = 'u8[8192]{0}', space=vmem, size = 0x2000, scoped, tag = 'input window, operand 0']
    #allocation4 [shape = 's32[2]{0}', space=sflag, size = 0x8, scoped, tag = 'scoped memory for tpu_custom_call.1']
    #allocation5 [shape = 's32[2]{0}', space=sflag, size = 0x8, scoped, tag = 'scoped memory for tpu_custom_call.1']
    #allocation6 [shape = 'u8[16384]{0}', space=vmem, size = 0x4000, scoped, tag = 'input window, operand 1, single buffered']
    #allocation7 [shape = 's32[1]{0}', space=sflag, size = 0x4, scoped, tag = 'scoped memory for tpu_custom_call.1']
    #allocation8 [shape = 'u8[65536]{0}', space=vmem, size = 0x10000, scoped, tag = 'input window, operand 2, single buffered']
    #allocation9 [shape = 'u8[16384]{0}', space=vmem, size = 0x4000, scoped, tag = 'output window, operand 0']
    %9 = vsyncpa [#allocation4], 0
    %s10 = scalar_lea.sflag [#allocation4], 1
    %11 = vsyncpa %s10, 0
    %12 = vsyncpa [#allocation7], 0
    %13 = vsyncpa [#allocation5], 0
    %s14 = scalar_lea.sflag [#allocation5], 1
    %15 = vsyncpa %s14, 0
    loop: start=0, step=1, limit=4
    $region2: #{tpu_custom_call.1} parent=1 // loop_pre_header
      _
    $region3: #{tpu_custom_call.1} parent=1 // loop_header
      %s17 = sphi 0, %s21
      %p18 = scmp.ge.s32.totalorder %s17, 4
      %s24 = sphi 0, %s36
      %s25 = sphi 0, %s32
      %s26 = sphi 0, %s24
      %s27 = sphi 0, %s25
      %s28 = sphi 0, %s26
      %s29 = sphi 0, %s27
      %s41 = sphi 0, %s43
      %s44 = sphi 0, %s41
      %s45 = sphi 0, %s44
      %s61 = sphi 0, %s45
      %s67 = sphi 0, %s69
      %s70 = sphi 0, %s67
      %s71 = sphi 0, %s70
      %s87 = sphi 0, %s71
      %s91 = sphi 0, %s91
      %s93 = sphi 0, %s91
      %s94 = sphi 0, %s93
      %s108 = sphi 0, %s94
      %s112 = sphi 0, %s112
      %s114 = sphi 0, %s112
      %s115 = sphi 0, %s114
      %s129 = sphi 0, %s115
      %s135 = sphi 0, %s137
      %s138 = sphi 0, %s135
      %s139 = sphi 0, %s138
      %s155 = sphi 0, %s139
    $region4: #{tpu_custom_call.1} parent=1 // loop_header_branch
      %20 = sbr.rel (%p18) target = $region8
    $region5: #{tpu_custom_call.1} parent=1 // loop_body
      %s22 = ssub.s32 %s17, 1
      %s23 = ssub.s32 %s17, 2
      %s30 = sadd.s32 1, %s25
      %p31 = scmp.ge.s32.totalorder %s30, 1
      %s32 = scalar_select %p31, 0, %s30
      %s33 = sadd.s32 1, %s24
      %s34 = scalar_select %p31, %s33, %s24
      %p35 = scmp.ge.s32.totalorder %s34, 2
      %s36 = scalar_select %p35, 0, %s34
      %s37 = ssub.s32 %s24, %s36
      %s38 = ssub.s32 %s25, %s32
      %s39 = sor.u32 %s37, %s38
      %p40 = scmp.eq.s32.totalorder %s39, 0
      %s42 = sadd.s32 %s41, 1
      %s43 = scalar_select %p40, %s41, %s42
      %p46 = pneg %p40
      %p47 = scmp.eq.s32.totalorder %s17, 1
      %p48 = por %p46, %p47
      %p49 = scmp.ne.s32.totalorder %s41, %s44
      %p50 = scmp.eq.s32.totalorder %s17, 0
      %p51 = por %p49, %p50
      %p52 = scmp.ne.s32.totalorder %s41, %s44
      %p53 = scmp.eq.s32.totalorder %s22, 1
      %p54 = por %p52, %p53
      %p55 = scmp.ne.s32.totalorder %s44, %s45
      %p56 = scmp.eq.s32.totalorder %s22, 0
      %p57 = por %p55, %p56
      %p58 = scmp.ne.s32.totalorder %s44, %s45
      %p59 = scmp.eq.s32.totalorder %s23, 1
      %p60 = por %p58, %p59
      %p62 = scmp.ne.s32.totalorder %s45, %s61
      %p63 = scmp.eq.s32.totalorder %s23, 0
      %p64 = por %p62, %p63
      %s65 = ssub.s32 %s25, %s32
      %p66 = scmp.eq.s32.totalorder %s65, 0
      %s68 = sadd.s32 %s67, 1
      %s69 = scalar_select %p66, %s67, %s68
      %p72 = pneg %p66
      %p73 = scmp.eq.s32.totalorder %s17, 1
      %p74 = por %p72, %p73
      %p75 = scmp.ne.s32.totalorder %s67, %s70
      %p76 = scmp.eq.s32.totalorder %s17, 0
      %p77 = por %p75, %p76
      %p78 = scmp.ne.s32.totalorder %s67, %s70
      %p79 = scmp.eq.s32.totalorder %s22, 1
      %p80 = por %p78, %p79
      %p81 = scmp.ne.s32.totalorder %s70, %s71
      %p82 = scmp.eq.s32.totalorder %s22, 0
      %p83 = por %p81, %p82
      %p84 = scmp.ne.s32.totalorder %s70, %s71
      %p85 = scmp.eq.s32.totalorder %s23, 1
      %p86 = por %p84, %p85
      %p88 = scmp.ne.s32.totalorder %s71, %s87
      %p89 = scmp.eq.s32.totalorder %s23, 0
      %p90 = por %p88, %p89
      %s92 = sadd.s32 %s91, 1
      %p95 = scmp.eq.s32.totalorder %s17, 1
      %p96 = scmp.ne.s32.totalorder %s91, %s93
      %p97 = scmp.eq.s32.totalorder %s17, 0
      %p98 = por %p96, %p97
      %p99 = scmp.ne.s32.totalorder %s91, %s93
      %p100 = scmp.eq.s32.totalorder %s22, 1
      %p101 = por %p99, %p100
      %p102 = scmp.ne.s32.totalorder %s93, %s94
      %p103 = scmp.eq.s32.totalorder %s22, 0
      %p104 = por %p102, %p103
      %p105 = scmp.ne.s32.totalorder %s93, %s94
      %p106 = scmp.eq.s32.totalorder %s23, 1
      %p107 = por %p105, %p106
      %p109 = scmp.ne.s32.totalorder %s94, %s108
      %p110 = scmp.eq.s32.totalorder %s23, 0
      %p111 = por %p109, %p110
      %s113 = sadd.s32 %s112, 1
      %p116 = scmp.eq.s32.totalorder %s17, 1
      %p117 = scmp.ne.s32.totalorder %s112, %s114
      %p118 = scmp.eq.s32.totalorder %s17, 0
      %p119 = por %p117, %p118
      %p120 = scmp.ne.s32.totalorder %s112, %s114
      %p121 = scmp.eq.s32.totalorder %s22, 1
      %p122 = por %p120, %p121
      %p123 = scmp.ne.s32.totalorder %s114, %s115
      %p124 = scmp.eq.s32.totalorder %s22, 0
      %p125 = por %p123, %p124
      %p126 = scmp.ne.s32.totalorder %s114, %s115
      %p127 = scmp.eq.s32.totalorder %s23, 1
      %p128 = por %p126, %p127
      %p130 = scmp.ne.s32.totalorder %s115, %s129
      %p131 = scmp.eq.s32.totalorder %s23, 0
      %p132 = por %p130, %p131
      %s133 = ssub.s32 %s24, %s36
      %p134 = scmp.eq.s32.totalorder %s133, 0
      %s136 = sadd.s32 %s135, 1
      %s137 = scalar_select %p134, %s135, %s136
      %p140 = pneg %p134
      %p141 = scmp.eq.s32.totalorder %s17, 1
      %p142 = por %p140, %p141
      %p143 = scmp.ne.s32.totalorder %s135, %s138
      %p144 = scmp.eq.s32.totalorder %s17, 0
      %p145 = por %p143, %p144
      %p146 = scmp.ne.s32.totalorder %s135, %s138
      %p147 = scmp.eq.s32.totalorder %s22, 1
      %p148 = por %p146, %p147
      %p149 = scmp.ne.s32.totalorder %s138, %s139
      %p150 = scmp.eq.s32.totalorder %s22, 0
      %p151 = por %p149, %p150
      %p152 = scmp.ne.s32.totalorder %s138, %s139
      %p153 = scmp.eq.s32.totalorder %s23, 1
      %p154 = por %p152, %p153
      %p156 = scmp.ne.s32.totalorder %s139, %s155
      %p157 = scmp.eq.s32.totalorder %s23, 0
      %p158 = por %p156, %p157
      %p159 = scmp.le.s32.totalorder 1, %s17
      %p160 = scmp.lt.s32.totalorder %s17, 3
      %p161 = pnand %p159, %p160
      %p162 = pneg %p161
      // Predicated region
      $region9: #{tpu_custom_call.1} parent=5 // pred_check
        _
      $region10: #{tpu_custom_call.1} parent=5 // pred_check_branch
        %164 = sbr.rel (%p161) target = $region12
      $region11: #{tpu_custom_call.1} parent=5 // pred_region
        %s165 = ssub.s32 %s17, 1
        // Predicated region
        $region13: #{tpu_custom_call.1} parent=11 // pred_check
          %p166 = pneg %p83
        $region14: #{tpu_custom_call.1} parent=11 // pred_check_branch
          %168 = sbr.rel (%p166) target = $region16
        $region15: #{tpu_custom_call.1} parent=11 // pred_region
          %s169 = smul.u32 8, %s27
          %s171 = ssub.s32 512, 512
          %172 = vsyncadd [#allocation7], %s171
          %s173 = smul.addr %s169, 64
          %s174 = scalar_lea.hbm %s1, %s173
          %s175 = sshll.u32 [#allocation6], 4
          %s176 = int_to_ptr.vmem [resolvable:$true] %s175
          %181 = dma.hbm_to_vmem [thread:$0]  %s174, 512, %s176, [#allocation7], 64, 64, 4
        $region16: #{tpu_custom_call.1} parent=11 // pred_fallthru
          _
        // Predicated region
        $region17: #{tpu_custom_call.1} parent=11 // pred_check
          %p182 = pneg %p104
        $region18: #{tpu_custom_call.1} parent=11 // pred_check_branch
          %184 = sbr.rel (%p182) target = $region20
        $region19: #{tpu_custom_call.1} parent=11 // pred_region
          %s186 = ssub.s32 2048, 2048
          %187 = vsyncadd [#allocation7], %s186
          %s188 = sshll.u32 [#allocation8], 4
          %s189 = int_to_ptr.vmem [resolvable:$true] %s188
          %194 = dma.hbm_to_vmem [thread:$0]  %s2, 2048, %s189, [#allocation7], 128, 128, 8
        $region20: #{tpu_custom_call.1} parent=11 // pred_fallthru
          _
        // Predicated region
        $region21: #{tpu_custom_call.1} parent=11 // pred_check
          %p195 = pneg %p125
        $region22: #{tpu_custom_call.1} parent=11 // pred_check_branch
          %197 = sbr.rel (%p195) target = $region24
        $region23: #{tpu_custom_call.1} parent=11 // pred_region
          _
        $region24: #{tpu_custom_call.1} parent=11 // pred_fallthru
          _
      $region12: #{tpu_custom_call.1} parent=5 // pred_fallthru
        _
      %p198 = scmp.lt.s32.totalorder %s17, 2
      // Predicated region
      $region25: #{tpu_custom_call.1} parent=5 // pred_check
        %p199 = pneg %p198
      $region26: #{tpu_custom_call.1} parent=5 // pred_check_branch
        %201 = sbr.rel (%p199) target = $region28
      $region27: #{tpu_custom_call.1} parent=5 // pred_region
        // Predicated region
        $region29: #{tpu_custom_call.1} parent=27 // pred_check
          %p202 = pneg %p51
        $region30: #{tpu_custom_call.1} parent=27 // pred_check_branch
          %204 = sbr.rel (%p202) target = $region32
        $region31: #{tpu_custom_call.1} parent=27 // pred_region
          %s205 = sand.u32 %s41, 1
          %s206 = scalar_lea.sflag [#allocation4], %s205
          %s207 = sand.u32 %s41, 1
          %s208 = smul.addr %s207, 8
          %s209 = scalar_lea.vmem [#allocation3], %s208
          %s210 = smul.u32 2, %s24
          %s212 = ssub.s32 128, 128
          %213 = vsyncadd %s206, %s212
          %s214 = sadd.s32 %s25, %s210
          %s215 = smul.addr %s214, 64
          %s216 = scalar_lea.hbm %s0, %s215
          %s217 = sshll.u32 %s209, 4
          %s218 = int_to_ptr.vmem [resolvable:$true] %s217
          %223 = dma.hbm_to_vmem [thread:$0]  %s216, 128, %s218, %s206, 64, 64, 4
        $region32: #{tpu_custom_call.1} parent=27 // pred_fallthru
          _
      $region28: #{tpu_custom_call.1} parent=5 // pred_fallthru
        _
      %p224 = scmp.le.s32.totalorder 1, %s17
      %p225 = scmp.lt.s32.totalorder %s17, 3
      %p226 = pnand %p224, %p225
      %p227 = pneg %p226
      // Predicated region
      $region33: #{tpu_custom_call.1} parent=5 // pred_check
        _
      $region34: #{tpu_custom_call.1} parent=5 // pred_check_branch
        %229 = sbr.rel (%p226) target = $region36
      $region35: #{tpu_custom_call.1} parent=5 // pred_region
        %s230 = ssub.s32 %s17, 1
        %s231 = sand.u32 %s44, 1
        %s232 = scalar_lea.sflag [#allocation4], %s231
        %s233 = sand.u32 %s44, 1
        %s234 = smul.addr %s233, 8
        %s235 = scalar_lea.vmem [#allocation3], %s234
        // Predicated region
        $region37: #{tpu_custom_call.1} parent=35 // pred_check
          %p236 = pneg %p57
        $region38: #{tpu_custom_call.1} parent=35 // pred_check_branch
          %238 = sbr.rel (%p236) target = $region40
        $region39: #{tpu_custom_call.1} parent=35 // pred_region
          %239 = dma.done %s232, 128
        $region40: #{tpu_custom_call.1} parent=35 // pred_fallthru
          _
        // Predicated region
        $region41: #{tpu_custom_call.1} parent=35 // pred_check
          %p240 = pneg %p83
        $region42: #{tpu_custom_call.1} parent=35 // pred_check_branch
          %242 = sbr.rel (%p240) target = $region44
        $region43: #{tpu_custom_call.1} parent=35 // pred_region
          %243 = dma.done [#allocation7], 512
        $region44: #{tpu_custom_call.1} parent=35 // pred_fallthru
          _
        // Predicated region
        $region45: #{tpu_custom_call.1} parent=35 // pred_check
          %p244 = pneg %p104
        $region46: #{tpu_custom_call.1} parent=35 // pred_check_branch
          %246 = sbr.rel (%p244) target = $region48
        $region47: #{tpu_custom_call.1} parent=35 // pred_region
          %247 = dma.done [#allocation7], 2048
        $region48: #{tpu_custom_call.1} parent=35 // pred_fallthru
          _
        %s248 = sand.u32 %s44, 1
        %s249 = scalar_lea.sflag [#allocation4], %s248
        %s250 = sand.u32 %s44, 1
        %s251 = smul.addr %s250, 8
        %s252 = scalar_lea.vmem [#allocation3], %s251
        %p253 = pneg %p57
        %p254 = pneg %p54
        %p255 = pneg %p83
        %p256 = pneg %p80
        %p257 = pneg %p104
        %p258 = pneg %p101
        %p259 = pneg %p125
        %p260 = pneg %p122
        %p261 = pneg %p151
        %p262 = pneg %p148
        %s263 = sand.u32 %s138, 1
        %s264 = scalar_lea.sflag [#allocation5], %s263
        %s265 = sand.u32 %s138, 1
        %s266 = smul.addr %s265, 16
        %s267 = scalar_lea.vmem [#allocation9], %s266
        %s268 = smul.u32 2, %s26
        %s269 = smul.u32 8, %s27
        %s270 = smul.u32 2, %s26
        %p272 = scmp.eq.s32.totalorder %s27, 0
        // Predicated region
        $region49: #{tpu_custom_call.1} parent=35 // pred_check
          %p273 = pneg %p272
        $region50: #{tpu_custom_call.1} parent=35 // pred_check_branch
          %275 = sbr.rel (%p273) target = $region52
        $region51: #{tpu_custom_call.1} parent=35 // pred_region
          %276 = vst [vmem:[#allocation2] sm:$0xff] 0.0
          %277 = vst [vmem:[#allocation2 + $0x8] sm:$0xff] 0.0
        $region52: #{tpu_custom_call.1} parent=35 // pred_fallthru
          _
        %v278 = vld [vmem:[#allocation2] sm:$0xff]
        %v279 = vld [vmem:[#allocation2 + $0x8] sm:$0xff]
        %v280 = vld [vmem:[%s235] sm:$0xf]
        %v281 = vld [vmem:[%s235 + $0x4] sm:$0xf]
        %v282 = vld [vmem:[#allocation6] sm:$0xf]
        %v283 = vld [vmem:[#allocation6 + $0x4] sm:$0xf]
        %v284 = vld [vmem:[#allocation6 + $0x8] sm:$0xf]
        %v285 = vld [vmem:[#allocation6 + $0xc] sm:$0xf]
        %v286 = vld [vmem:[#allocation6 + $0x10] sm:$0xf]
        %v287 = vld [vmem:[#allocation6 + $0x14] sm:$0xf]
        %v288 = vld [vmem:[#allocation6 + $0x18] sm:$0xf]
        %v289 = vld [vmem:[#allocation6 + $0x1c] sm:$0xf]
        %v292 = vunpack.c.l.b16 %v280
        %v293 = vunpack.c.l.b16 %v281
        %v294 = vpack.c.b16 %v293, %v292
        %v303 = vunpack.c.l.b16 %v282
        %v304 = vunpack.c.l.b16 %v283
        %v305 = vunpack.c.l.b16 %v284
        %v306 = vunpack.c.l.b16 %v285
        %v307 = vunpack.c.l.b16 %v286
        %v308 = vunpack.c.l.b16 %v287
        %v309 = vunpack.c.l.b16 %v288
        %v310 = vunpack.c.l.b16 %v289
        %v311 = vpack.c.b16 %v304, %v303
        %v312 = vpack.c.b16 %v306, %v305
        %v313 = vpack.c.b16 %v308, %v307
        %v314 = vpack.c.b16 %v310, %v309
        %vm319 = vcmask 523264
        %v321 = vsel %vm319, %v294, 0
        %323 = vmatprep.subr.bf16.mxu0 0
        %324 = vmatpush1.bf16.msra.mxu0 %v311
        %325 = vmatprep.subr.bf16.mxu0 0
        %326 = vmatpush1.bf16.msra.mxu0 %v312
        %327 = vmatprep.subr.bf16.mxu0 0
        %328 = vmatpush1.bf16.msra.mxu0 %v313
        %329 = vmatprep.subr.bf16.mxu0 0
        %330 = vmatpush1.bf16.msra.mxu0 %v314
        %331 = vmatprep.subr.bf16.mxu0 0
        %332 = vmatpush1.bf16.msra.mxu0 0
        %333 = vmatprep.subr.bf16.mxu0 0
        %334 = vmatpush1.bf16.msra.mxu0 0
        %335 = vmatprep.subr.bf16.mxu0 0
        %336 = vmatpush1.bf16.msra.mxu0 0
        %337 = vmatprep.subr.bf16.mxu0 0
        %338 = vmatpush1.bf16.msra.mxu0 0
        %339 = vmatprep.subr.bf16.mxu0 0
        %340 = vmatpush1.bf16.msra.mxu0 0
        %341 = vmatprep.subr.bf16.mxu0 0
        %342 = vmatpush1.bf16.msra.mxu0 0
        %343 = vmatprep.subr.bf16.mxu0 0
        %344 = vmatpush1.bf16.msra.mxu0 0
        %345 = vmatprep.subr.bf16.mxu0 0
        %346 = vmatpush1.bf16.msra.mxu0 0
        %347 = vmatprep.subr.bf16.mxu0 0
        %348 = vmatpush1.bf16.msra.mxu0 0
        %349 = vmatprep.subr.bf16.mxu0 0
        %350 = vmatpush1.bf16.msra.mxu0 0
        %351 = vmatprep.subr.bf16.mxu0 0
        %352 = vmatpush1.bf16.msra.mxu0 0
        %353 = vmatprep.subr.bf16.mxu0 0
        %354 = vmatpush1.bf16.msra.mxu0 0
        %355 = vmatprep.mubr.bf16.mxu0 0
        %356 = vmatmul.mubr.bf16.gmra.mrb[0].mxu0 %v321
        %v357 = vpop.f32.mrb[0].mxu0
        %v358 = vadd.f32 0.0, %v357
        %v359 = vpop.f32.mrb[0].mxu0
        %v360 = vpop.f32.mrb[0].mxu0
        %v361 = vadd.f32 0.0, %v360
        %v362 = vpop.f32.mrb[0].mxu0
        %363 = vdwg.mxu0
        %v364 = vadd.f32 %v278, %v358
        %v365 = vadd.f32 %v279, %v361
        %366 = vst [vmem:[#allocation2] sm:$0xff] %v364
        %367 = vst [vmem:[#allocation2 + $0x8] sm:$0xff] %v365
        // Predicated region
        $region53: #{tpu_custom_call.1} parent=35 // pred_check
          %p368 = pneg %p272
        $region54: #{tpu_custom_call.1} parent=35 // pred_check_branch
          %370 = sbr.rel (%p368) target = $region56
        $region55: #{tpu_custom_call.1} parent=35 // pred_region
          %v371 = vld [vmem:[#allocation2] sm:$0xff]
          %v372 = vld [vmem:[#allocation2 + $0x8] sm:$0xff]
          %v373 = vpack.c.bf16 %v372, %v371
          %v374 = vld [vmem:[#allocation8] sm:$0xff]
          %v375 = vld [vmem:[#allocation8 + $0x8] sm:$0xff]
          %v376 = vld [vmem:[#allocation8 + $0x10] sm:$0xff]
          %v377 = vld [vmem:[#allocation8 + $0x18] sm:$0xff]
          %v378 = vld [vmem:[#allocation8 + $0x20] sm:$0xff]
          %v379 = vld [vmem:[#allocation8 + $0x28] sm:$0xff]
          %v380 = vld [vmem:[#allocation8 + $0x30] sm:$0xff]
          %v381 = vld [vmem:[#allocation8 + $0x38] sm:$0xff]
          %v382 = vld [vmem:[#allocation8 + $0x40] sm:$0xff]
          %v383 = vld [vmem:[#allocation8 + $0x48] sm:$0xff]
          %v384 = vld [vmem:[#allocation8 + $0x50] sm:$0xff]
          %v385 = vld [vmem:[#allocation8 + $0x58] sm:$0xff]
          %v386 = vld [vmem:[#allocation8 + $0x60] sm:$0xff]
          %v387 = vld [vmem:[#allocation8 + $0x68] sm:$0xff]
          %v388 = vld [vmem:[#allocation8 + $0x70] sm:$0xff]
          %v389 = vld [vmem:[#allocation8 + $0x78] sm:$0xff]
          %v390 = vld [vmem:[%s3] sm:$0x3]
          %v392 = vlaneseq
          %v393 = vshrl.u32 %v392, 7
          %v394 = vsub.s32 0, %v393
          %v395 = vrot.slane %v390, %v394
          %v396 = vlaneseq
          %v397 = vshrl.u32 %v396, 7
          %v398 = vsub.s32 1, %v397
          %v399 = vrot.slane %v390, %v398
          %v418 = vunpack.c.l.b16 %v374
          %v419 = vunpack.c.h.b16 %v374
          %v420 = vunpack.c.l.b16 %v375
          %v421 = vunpack.c.h.b16 %v375
          %v422 = vunpack.c.l.b16 %v376
          %v423 = vunpack.c.h.b16 %v376
          %v424 = vunpack.c.l.b16 %v377
          %v425 = vunpack.c.h.b16 %v377
          %v426 = vunpack.c.l.b16 %v378
          %v427 = vunpack.c.h.b16 %v378
          %v428 = vunpack.c.l.b16 %v379
          %v429 = vunpack.c.h.b16 %v379
          %v430 = vunpack.c.l.b16 %v380
          %v431 = vunpack.c.h.b16 %v380
          %v432 = vunpack.c.l.b16 %v381
          %v433 = vunpack.c.h.b16 %v381
          %v434 = vunpack.c.l.b16 %v382
          %v435 = vunpack.c.h.b16 %v382
          %v436 = vunpack.c.l.b16 %v383
          %v437 = vunpack.c.h.b16 %v383
          %v438 = vunpack.c.l.b16 %v384
          %v439 = vunpack.c.h.b16 %v384
          %v440 = vunpack.c.l.b16 %v385
          %v441 = vunpack.c.h.b16 %v385
          %v442 = vunpack.c.l.b16 %v386
          %v443 = vunpack.c.h.b16 %v386
          %v444 = vunpack.c.l.b16 %v387
          %v445 = vunpack.c.h.b16 %v387
          %v446 = vunpack.c.l.b16 %v388
          %v447 = vunpack.c.h.b16 %v388
          %v448 = vunpack.c.l.b16 %v389
          %v449 = vunpack.c.h.b16 %v389
          %v450 = vpack.c.b16 %v420, %v418
          %v451 = vpack.c.b16 %v421, %v419
          %v452 = vpack.c.b16 %v424, %v422
          %v453 = vpack.c.b16 %v425, %v423
          %v454 = vpack.c.b16 %v428, %v426
          %v455 = vpack.c.b16 %v429, %v427
          %v456 = vpack.c.b16 %v432, %v430
          %v457 = vpack.c.b16 %v433, %v431
          %v458 = vpack.c.b16 %v436, %v434
          %v459 = vpack.c.b16 %v437, %v435
          %v460 = vpack.c.b16 %v440, %v438
          %v461 = vpack.c.b16 %v441, %v439
          %v462 = vpack.c.b16 %v444, %v442
          %v463 = vpack.c.b16 %v445, %v443
          %v464 = vpack.c.b16 %v448, %v446
          %v465 = vpack.c.b16 %v449, %v447
          %482 = vmatprep.subr.bf16.mxu0 %v451
          %483 = vmatpush1.bf16.msra.mxu0 %v450
          %484 = vmatprep.subr.bf16.mxu0 %v453
          %485 = vmatpush1.bf16.msra.mxu0 %v452
          %486 = vmatprep.subr.bf16.mxu0 %v455
          %487 = vmatpush1.bf16.msra.mxu0 %v454
          %488 = vmatprep.subr.bf16.mxu0 %v457
          %489 = vmatpush1.bf16.msra.mxu0 %v456
          %490 = vmatprep.subr.bf16.mxu0 %v459
          %491 = vmatpush1.bf16.msra.mxu0 %v458
          %492 = vmatprep.subr.bf16.mxu0 %v461
          %493 = vmatpush1.bf16.msra.mxu0 %v460
          %494 = vmatprep.subr.bf16.mxu0 %v463
          %495 = vmatpush1.bf16.msra.mxu0 %v462
          %496 = vmatprep.subr.bf16.mxu0 %v465
          %497 = vmatpush1.bf16.msra.mxu0 %v464
          %498 = vmatprep.subr.bf16.mxu0 0
          %499 = vmatpush1.bf16.msra.mxu0 0
          %500 = vmatprep.subr.bf16.mxu0 0
          %501 = vmatpush1.bf16.msra.mxu0 0
          %502 = vmatprep.subr.bf16.mxu0 0
          %503 = vmatpush1.bf16.msra.mxu0 0
          %504 = vmatprep.subr.bf16.mxu0 0
          %505 = vmatpush1.bf16.msra.mxu0 0
          %506 = vmatprep.subr.bf16.mxu0 0
          %507 = vmatpush1.bf16.msra.mxu0 0
          %508 = vmatprep.subr.bf16.mxu0 0
          %509 = vmatpush1.bf16.msra.mxu0 0
          %510 = vmatprep.subr.bf16.mxu0 0
          %511 = vmatpush1.bf16.msra.mxu0 0
          %512 = vmatprep.subr.bf16.mxu0 0
          %513 = vmatpush1.bf16.msra.mxu0 0
          %514 = vmatprep.mubr.bf16.mxu0 0
          %515 = vmatmul.mubr.bf16.gmra.mrb[0].mxu0 %v373
          %v516 = vpop.f32.mrb[0].mxu0
          %v517 = vadd.f32 %v395, %v516
          %v518 = vpop.f32.mrb[0].mxu0
          %v519 = vadd.f32 %v399, %v518
          %v520 = vpop.f32.mrb[0].mxu0
          %v521 = vadd.f32 %v395, %v520
          %v522 = vpop.f32.mrb[0].mxu0
          %v523 = vadd.f32 %v399, %v522
          %524 = vdwg.mxu0
          %v525 = vmax.f32 %v517, 0.0
          %v526 = vmax.f32 %v519, 0.0
          %v527 = vmax.f32 %v521, 0.0
          %v528 = vmax.f32 %v523, 0.0
          %v529 = vpack.c.bf16 %v527, %v525
          %v530 = vpack.c.bf16 %v528, %v526
          %v533 = vunpack.c.l.b16 %v529
          %v534 = vunpack.c.l.b16 %v530
          %v535 = vunpack.c.h.b16 %v529
          %v536 = vunpack.c.h.b16 %v530
          %v537 = vpack.c.b16 %v534, %v533
          %v538 = vpack.c.b16 %v536, %v535
          %541 = vst [vmem:[%s267] sm:$0xff] %v537
          %542 = vst [vmem:[%s267 + $0x8] sm:$0xff] %v538
        $region56: #{tpu_custom_call.1} parent=35 // pred_fallthru
          _
        %s543 = sand.u32 %s138, 1
        %s544 = scalar_lea.sflag [#allocation5], %s543
        %s545 = sand.u32 %s138, 1
        %s546 = smul.addr %s545, 16
        %s547 = scalar_lea.vmem [#allocation9], %s546
        // Predicated region
        $region57: #{tpu_custom_call.1} parent=35 // pred_check
          %p548 = pneg %p148
        $region58: #{tpu_custom_call.1} parent=35 // pred_check_branch
          %550 = sbr.rel (%p548) target = $region60
        $region59: #{tpu_custom_call.1} parent=35 // pred_region
          %s551 = smul.u32 2, %s26
          %s553 = ssub.s32 256, 256
          %554 = vsyncadd %s544, %s553
          %s555 = smul.addr %s551, 2
          %s556 = smul.addr %s555, 64
          %s557 = scalar_lea.hbm %s4, %s556
          %s558 = sshll.u32 %s547, 4
          %s559 = int_to_ptr.vmem [resolvable:$true] %s558
          %564 = dma.vmem_to_hbm [thread:$0]  %s559, 256, %s557, %s544, 128, 128, 8
        $region60: #{tpu_custom_call.1} parent=35 // pred_fallthru
          _
      $region36: #{tpu_custom_call.1} parent=5 // pred_fallthru
        _
      %p565 = scmp.le.s32.totalorder 2, %s17
      // Predicated region
      $region61: #{tpu_custom_call.1} parent=5 // pred_check
        %p566 = pneg %p565
      $region62: #{tpu_custom_call.1} parent=5 // pred_check_branch
        %568 = sbr.rel (%p566) target = $region64
      $region63: #{tpu_custom_call.1} parent=5 // pred_region
        %s569 = ssub.s32 %s17, 2
        // Predicated region
        $region65: #{tpu_custom_call.1} parent=63 // pred_check
          %p570 = pneg %p154
        $region66: #{tpu_custom_call.1} parent=63 // pred_check_branch
          %572 = sbr.rel (%p570) target = $region68
        $region67: #{tpu_custom_call.1} parent=63 // pred_region
          %s573 = sand.u32 %s139, 1
          %s574 = scalar_lea.sflag [#allocation5], %s573
          %s575 = sand.u32 %s139, 1
          %s576 = smul.addr %s575, 16
          %s577 = scalar_lea.vmem [#allocation9], %s576
          %578 = dma.done %s574, 256
        $region68: #{tpu_custom_call.1} parent=63 // pred_fallthru
          _
      $region64: #{tpu_custom_call.1} parent=5 // pred_fallthru
        _
    $region6: #{tpu_custom_call.1} parent=1 // loop_footer
      %s21 = sadd.s32 1, %s17
    $region7: #{tpu_custom_call.1} parent=1 // loop_footer_branch
      %16 = sbr.rel target = $region3
    $region8: #{tpu_custom_call.1} parent=1 // loop_exit
      _
    %579 = vsyncpa [#allocation4], 1
    %s580 = scalar_lea.sflag [#allocation4], 1
    %581 = vsyncpa %s580, 1
    %582 = vsyncpa [#allocation7], 1
    %583 = vsyncpa [#allocation5], 1
    %s584 = scalar_lea.sflag [#allocation5], 1
    %585 = vsyncpa %s584, 1

</llo_original>
